<compile_context>
chip_gen: v7x
topology: tpu7x:2x2x1
jax: 0.10.0
libtpu: 0.0.40
codegen_flags: <defaults>
</compile_context>

<pallas_src>
import jax
import jax.numpy as jnp
from jax import lax
from jax.experimental import pallas as pl
from jax.experimental.pallas import tpu as pltpu

# ------------------------- config (small synthetic sizes) -------------------
B = 2                       # real batch
BP = 8                      # batch padded to one sublane tile
H = 32                      # "config.hidden_size"
H2 = 2 * H                  # concat fusion width
NUM_CLASSES = 3
CPAD = 128                  # classifier width padded to one full lane tile
QK_PAD = 128                # q / k width padded to one full lane tile
HEAD_W = 2 * QK_PAD + CPAD  # fused [Wq | Wk | Wv@Wc] width = 384
SEQ = 8                     # text sequence length
VOCAB = 50
VOCAB_PAD = 128             # vocab padded to one lane tile (zero rows)
IMG_C, IMG_HW = 3, 16
IMG_FLAT = IMG_C * IMG_HW * IMG_HW

# narrow (32-lane) weight slab row offsets
_EMB_OFF = 0
_POOL_OFF = VOCAB_PAD                 # 128
_IMG_OFF = VOCAB_PAD + H              # 160
_NARROW_ROWS = VOCAB_PAD + H + IMG_FLAT   # 928
# wide (384-lane) weight slab row offsets
_WT_OFF = 0
_WI_OFF = H                           # 32
_BH_OFF = 2 * H                       # 64
_WIDE_ROWS = 2 * H + BP               # 72


# ------------------------------ Pallas kernel --------------------------------
def multimodal_forward_kernel(
    tok_ref,       # (BP, SEQ)          int32 token ids (zero padded rows)
    img_ref,       # (BP, IMG_FLAT)     f32 flattened NCHW image (zero padded rows)
    wn_ref,        # (_NARROW_ROWS, H)  f32 [emb_pad | w_pool | w_img]
    ww_ref,        # (_WIDE_ROWS, HEAD_W) f32 [wt_head | wi_head | b_head x BP]
    out_ref,       # (BP, CPAD)         lane-dense logits (valid = [:B, :NUM_CLASSES])
):
    # ---- slab views (all row offsets are multiples of 8: no tile crossing)
    emb = wn_ref[_EMB_OFF:_EMB_OFF + VOCAB_PAD, :]          # (128, H)
    w_pool = wn_ref[_POOL_OFF:_POOL_OFF + H, :]             # (H, H)
    w_img = wn_ref[_IMG_OFF:_IMG_OFF + IMG_FLAT, :]         # (IMG_FLAT, H)
    wt_head = ww_ref[_WT_OFF:_WT_OFF + H, :]                # (H, HEAD_W)
    wi_head = ww_ref[_WI_OFF:_WI_OFF + H, :]                # (H, HEAD_W)
    b_head = ww_ref[_BH_OFF:_BH_OFF + BP, :]                # (BP, HEAD_W)

    # ---- text backbone stub: embedding gather via token counts + mean-pool
    #      + tanh pooler.  counts @ emb == sum_s emb[tok[b, s]].
    tok = tok_ref[...]                                               # (BP, SEQ)
    viota = lax.broadcasted_iota(jnp.int32, (BP, SEQ, VOCAB_PAD), 2)
    counts = (tok[:, :, None] == viota).astype(jnp.float32).sum(axis=1)  # (BP, 128)
    mean_emb = jnp.dot(counts, emb,
                       preferred_element_type=jnp.float32) * (1.0 / SEQ)
    pooled = jnp.tanh(jnp.dot(mean_emb, w_pool,
                              preferred_element_type=jnp.float32))   # (BP, H)

    # ---- image backbone stub: flatten (wrapper) + linear projection
    #      (b_img is folded into b_head in fold_params).
    img_proj = jnp.dot(img_ref[...], w_img,
                       preferred_element_type=jnp.float32)           # (BP, H)

    # ---- fusion head: concat avoided by splitting the fused weight into
    #      text/image row halves; one wide matmul per modality yields Q, K and
    #      the classifier-folded V, all on 128-lane-aligned boundaries.
    y = (jnp.dot(pooled, wt_head, preferred_element_type=jnp.float32)
         + jnp.dot(img_proj, wi_head, preferred_element_type=jnp.float32)
         + b_head)                                                    # (BP, 384)
    q = y[:, :QK_PAD]                                                 # (BP, 128)
    k = y[:, QK_PAD:2 * QK_PAD]                                       # (BP, 128)
    vc = y[:, 2 * QK_PAD:]                                            # (BP, 128)

    # ---- SelfAttention over the batch axis (matches the PyTorch module):
    #      scores (BP, BP), softmax over dim=1, no 1/sqrt(d) scaling.
    #      Padded batch entries are masked out of the key axis.
    s = lax.dot_general(q, k, (((1,), (1,)), ((), ())),
                        preferred_element_type=jnp.float32)           # q @ k.T
    col = lax.broadcasted_iota(jnp.int32, (BP, BP), 1)
    s = jnp.where(col < B, s, -1e30)
    s = s - jnp.max(s, axis=1, keepdims=True)
    e = jnp.exp(s)
    # EUP approximate reciprocal (free slot); ~1e-4-level relative error.
    a = e * pl.reciprocal(jnp.sum(e, axis=1, keepdims=True), approx=True)

    # ---- (attn @ V) @ Wc + bc, with Wc and bc already folded into V / b_head.
    out_ref[...] = jnp.dot(a, vc, preferred_element_type=jnp.float32)


# ------------------------------- wrapper --------------------------------------
def multimodal_forward(tokens, image, fused_params):
    w_narrow, w_wide = fused_params
    b_real = tokens.shape[0]
    img_flat = image.reshape(b_real, -1)                 # contiguous NCHW flatten
    tok_pad = jnp.zeros((BP, SEQ), jnp.int32).at[:b_real].set(tokens)
    img_pad = jnp.zeros((BP, IMG_FLAT), jnp.float32).at[:b_real].set(img_flat)

    def vmem_spec():
        return pl.BlockSpec(memory_space=pltpu.MemorySpace.VMEM)

    out_pad = pl.pallas_call(
        multimodal_forward_kernel,
        out_shape=jax.ShapeDtypeStruct((BP, CPAD), jnp.float32),
        in_specs=[vmem_spec() for _ in range(4)],
        out_specs=vmem_spec(),
    )(tok_pad, img_pad, w_narrow, w_wide)
    return out_pad[:b_real, :NUM_CLASSES]


# ---------------------- parameters: raw module params + folding ---------------
def init_raw_params(key):
    ks = jax.random.split(key, 12)
    scale = 0.05
    wq = scale * jax.random.normal(ks[0], (H2, H2), jnp.float32)
    bq = scale * jax.random.normal(ks[1], (1, H2), jnp.float32)
    wk = scale * jax.random.normal(ks[2], (H2, H2), jnp.float32)
    bk = scale * jax.random.normal(ks[3], (1, H2), jnp.float32)
    wv = scale * jax.random.normal(ks[4], (H2, H2), jnp.float32)
    bv = scale * jax.random.normal(ks[5], (1, H2), jnp.float32)
    wc = scale * jax.random.normal(ks[6], (H2, NUM_CLASSES), jnp.float32)
    bc = scale * jax.random.normal(ks[7], (1, NUM_CLASSES), jnp.float32)
    emb = scale * jax.random.normal(ks[8], (VOCAB, H), jnp.float32)
    w_pool = scale * jax.random.normal(ks[9], (H, H), jnp.float32)
    w_img = scale * jax.random.normal(ks[10], (IMG_FLAT, H), jnp.float32)
    b_img = scale * jax.random.normal(ks[11], (H,), jnp.float32)
    return (wq, bq, wk, bk, wv, bv, wc, bc, emb, w_pool, w_img, b_img)


def fold_params(raw):
    """One-time wrapper-side algebra:
       * pad classifier to 128 lanes and fold Wc/bc into V ((a@v)@Wc == a@(v@Wc)),
       * zero-pad Wq/Wk (and their biases) to 128 columns (lane-aligned split),
       * fuse [Wq|Wk|Wv@Wc], split into text/image row halves, fold b_img,
       * pack everything into two contiguous VMEM slabs (32-lane and 384-lane)."""
    (wq, bq, wk, bk, wv, bv, wc, bc, emb, w_pool, w_img, b_img) = raw

    wc_pad = jnp.zeros((H2, CPAD), jnp.float32).at[:, :NUM_CLASSES].set(wc)
    bc_pad = jnp.zeros((1, CPAD), jnp.float32).at[:, :NUM_CLASSES].set(bc)
    wvc = wv @ wc_pad                                    # (2H, 128)
    bvc = bv @ wc_pad + bc_pad                           # (1, 128)  classifier bias folded

    wq_pad = jnp.zeros((H2, QK_PAD), jnp.float32).at[:, :H2].set(wq)
    bq_pad = jnp.zeros((1, QK_PAD), jnp.float32).at[:, :H2].set(bq)
    wk_pad = jnp.zeros((H2, QK_PAD), jnp.float32).at[:, :H2].set(wk)
    bk_pad = jnp.zeros((1, QK_PAD), jnp.float32).at[:, :H2].set(bk)

    w_all = jnp.concatenate([wq_pad, wk_pad, wvc], axis=1)    # (2H, 384)
    b_head = jnp.concatenate([bq_pad, bk_pad, bvc], axis=1)   # (1, 384)
    wt_head = w_all[:H]                                       # text rows
    wi_head = w_all[H:]                                       # image rows
    # fold image-projection bias: (img@W + b_img) @ wi == img@W@wi + b_img@wi
    b_head = b_head + b_img.reshape(1, H) @ wi_head           # (1, 384)
    b_head_slab = jnp.tile(b_head, (BP, 1))                   # (BP, 384) full-vreg add

    emb_pad = jnp.zeros((VOCAB_PAD, H), jnp.float32).at[:VOCAB].set(emb)
    w_narrow = jnp.concatenate([emb_pad, w_pool, w_img], axis=0)     # (928, 32)
    w_wide = jnp.concatenate([wt_head, wi_head, b_head_slab], axis=0)  # (72, 384)
    return (w_narrow, w_wide)


# ------------------------------- reference -----------------------------------
def reference_forward(tokens, image, raw):
    (wq, bq, wk, bk, wv, bv, wc, bc, emb, w_pool, w_img, b_img) = raw
    h = jnp.take(emb, tokens, axis=0)                    # (B, SEQ, H)
    pooled = jnp.tanh(h.mean(axis=1) @ w_pool)           # (B, H)
    img_feat = image.reshape(image.shape[0], -1) @ w_img + b_img   # (B, H)
    x = jnp.concatenate([pooled, img_feat], axis=1)      # (B, 2H)
    q = x @ wq + bq
    k = x @ wk + bk
    v = x @ wv + bv
    a = jax.nn.softmax(q @ k.T, axis=1)
    return a @ v @ wc + bc                               # (B, NUM_CLASSES)


# --------------------------------- main ---------------------------------------
if __name__ == "__main__":
    key = jax.random.PRNGKey(0)
    k_par, k_tok, k_img = jax.random.split(key, 3)

    raw = init_raw_params(k_par)
    fused = fold_params(raw)

    # inputs: tokenized text (B, SEQ) int32, image (B, 3, 16, 16) NCHW float32
    tokens = jax.random.randint(k_tok, (B, SEQ), 0, VOCAB, dtype=jnp.int32)
    image = jax.random.normal(k_img, (B, IMG_C, IMG_HW, IMG_HW), jnp.float32)

    fwd = jax.jit(multimodal_forward)
    out = jax.block_until_ready(fwd(tokens, image, fused))

    ref = reference_forward(tokens, image, raw)
    assert out.shape == (B, NUM_CLASSES)
    # tolerance accounts for the EUP approximate reciprocal in the softmax and
    # the (mathematically exact) classifier/bias folds & weight-fusion
    # reassociation of f32 accumulations.
    max_diff = float(jnp.max(jnp.abs(out - ref)))
    assert jnp.allclose(out, ref, atol=2e-3, rtol=2e-3), (
        f"mismatch vs JAX reference, max abs diff = {max_diff}")

    print("KERNEL_OK")
</pallas_src>

<mosaic_0001>
module attributes {stable_mosaic.version = 11 : i64} {
  func.func @multimodal_forward_kernel(%arg0: memref<8x8xi32, #tpu.memory_space<vmem>>, %arg1: memref<8x768xf32, #tpu.memory_space<vmem>>, %arg2: memref<928x32xf32, #tpu.memory_space<vmem>>, %arg3: memref<72x384xf32, #tpu.memory_space<vmem>>, %arg4: memref<8x128xf32, #tpu.memory_space<vmem>>) attributes {dimension_semantics = [], scalar_prefetch = 0 : i64, scratch_operands = 0 : i64, tpu.core_type = #tpu.core_type<tc>} {
    %c0 = arith.constant 0 : index
    %c0_0 = arith.constant 0 : index
    %0 = vector.load %arg2[%c0, %c0_0] : memref<928x32xf32, #tpu.memory_space<vmem>>, vector<128x32xf32>
    %c128 = arith.constant 128 : index
    %c0_1 = arith.constant 0 : index
    %1 = vector.load %arg2[%c128, %c0_1] : memref<928x32xf32, #tpu.memory_space<vmem>>, vector<32x32xf32>
    %c160 = arith.constant 160 : index
    %c0_2 = arith.constant 0 : index
    %2 = vector.load %arg2[%c160, %c0_2] : memref<928x32xf32, #tpu.memory_space<vmem>>, vector<768x32xf32>
    %c0_3 = arith.constant 0 : index
    %c0_4 = arith.constant 0 : index
    %3 = vector.load %arg3[%c0_3, %c0_4] : memref<72x384xf32, #tpu.memory_space<vmem>>, vector<32x384xf32>
    %c32 = arith.constant 32 : index
    %c0_5 = arith.constant 0 : index
    %4 = vector.load %arg3[%c32, %c0_5] : memref<72x384xf32, #tpu.memory_space<vmem>>, vector<32x384xf32>
    %c64 = arith.constant 64 : index
    %c0_6 = arith.constant 0 : index
    %5 = vector.load %arg3[%c64, %c0_6] : memref<72x384xf32, #tpu.memory_space<vmem>>, vector<8x384xf32>
    %c0_7 = arith.constant 0 : index
    %c0_8 = arith.constant 0 : index
    %6 = vector.load %arg0[%c0_7, %c0_8] : memref<8x8xi32, #tpu.memory_space<vmem>>, vector<8x8xi32>
    %7 = tpu.iota {dimensions = array<i32: 2>} : vector<8x8x128xi32>
    %8 = vector.shape_cast %6 : vector<8x8xi32> to vector<8x8x1xi32>
    %9 = vector.broadcast %8 : vector<8x8x1xi32> to vector<8x8x128xi32>
    %10 = arith.cmpi eq, %9, %7 : vector<8x8x128xi32>
    %11 = arith.extui %10 : vector<8x8x128xi1> to vector<8x8x128xi32>
    %12 = arith.sitofp %11 : vector<8x8x128xi32> to vector<8x8x128xf32>
    %cst = arith.constant dense<0.000000e+00> : vector<8x128xf32>
    %13 = vector.multi_reduction <add>, %12, %cst [1] : vector<8x8x128xf32> to vector<8x128xf32>
    %cst_9 = arith.constant dense<0.000000e+00> : vector<8x32xf32>
    %14 = tpu.matmul %13, %0, %cst_9 {dimension_numbers = #tpu.dot_dimension_numbers<[1], [0], [0], [1], [0, 0, 1, 1], [], []>} : vector<8x128xf32>, vector<128x32xf32>, vector<8x32xf32> -> vector<8x32xf32>
    %cst_10 = arith.constant 1.250000e-01 : f32
    %15 = vector.broadcast %cst_10 : f32 to vector<8x32xf32>
    %16 = arith.mulf %14, %15 : vector<8x32xf32>
    %cst_11 = arith.constant dense<0.000000e+00> : vector<8x32xf32>
    %17 = tpu.matmul %16, %1, %cst_11 {dimension_numbers = #tpu.dot_dimension_numbers<[1], [0], [0], [1], [0, 0, 1, 1], [], []>} : vector<8x32xf32>, vector<32x32xf32>, vector<8x32xf32> -> vector<8x32xf32>
    %18 = math.tanh %17 : vector<8x32xf32>
    %c0_12 = arith.constant 0 : index
    %c0_13 = arith.constant 0 : index
    %19 = vector.load %arg1[%c0_12, %c0_13] : memref<8x768xf32, #tpu.memory_space<vmem>>, vector<8x768xf32>
    %cst_14 = arith.constant dense<0.000000e+00> : vector<8x32xf32>
    %20 = tpu.matmul %19, %2, %cst_14 {dimension_numbers = #tpu.dot_dimension_numbers<[1], [0], [0], [1], [0, 0, 1, 1], [], []>} : vector<8x768xf32>, vector<768x32xf32>, vector<8x32xf32> -> vector<8x32xf32>
    %cst_15 = arith.constant dense<0.000000e+00> : vector<8x384xf32>
    %21 = tpu.matmul %18, %3, %cst_15 {dimension_numbers = #tpu.dot_dimension_numbers<[1], [0], [0], [1], [0, 0, 1, 1], [], []>} : vector<8x32xf32>, vector<32x384xf32>, vector<8x384xf32> -> vector<8x384xf32>
    %cst_16 = arith.constant dense<0.000000e+00> : vector<8x384xf32>
    %22 = tpu.matmul %20, %4, %cst_16 {dimension_numbers = #tpu.dot_dimension_numbers<[1], [0], [0], [1], [0, 0, 1, 1], [], []>} : vector<8x32xf32>, vector<32x384xf32>, vector<8x384xf32> -> vector<8x384xf32>
    %23 = arith.addf %21, %22 : vector<8x384xf32>
    %24 = arith.addf %23, %5 : vector<8x384xf32>
    %25 = vector.extract_strided_slice %24 {offsets = [0, 0], sizes = [8, 128], strides = [1, 1]} : vector<8x384xf32> to vector<8x128xf32>
    %26 = vector.extract_strided_slice %24 {offsets = [0, 128], sizes = [8, 128], strides = [1, 1]} : vector<8x384xf32> to vector<8x128xf32>
    %27 = vector.extract_strided_slice %24 {offsets = [0, 256], sizes = [8, 128], strides = [1, 1]} : vector<8x384xf32> to vector<8x128xf32>
    %cst_17 = arith.constant dense<0.000000e+00> : vector<8x8xf32>
    %28 = tpu.matmul %25, %26, %cst_17 {dimension_numbers = #tpu.dot_dimension_numbers<[1], [1], [0], [0], [0, 0, 1, 0], [], []>} : vector<8x128xf32>, vector<8x128xf32>, vector<8x8xf32> -> vector<8x8xf32>
    %29 = tpu.iota {dimensions = array<i32: 1>} : vector<8x8xi32>
    %c2_i32 = arith.constant 2 : i32
    %30 = vector.broadcast %c2_i32 : i32 to vector<8x8xi32>
    %31 = arith.cmpi slt, %29, %30 : vector<8x8xi32>
    %cst_18 = arith.constant -1.000000e+30 : f32
    %32 = vector.broadcast %cst_18 : f32 to vector<8x8xf32>
    %33 = arith.select %31, %28, %32 : vector<8x8xi1>, vector<8x8xf32>
    %cst_19 = arith.constant dense<0xFF800000> : vector<8xf32>
    %34 = vector.multi_reduction <maximumf>, %33, %cst_19 [1] : vector<8x8xf32> to vector<8xf32>
    %35 = vector.shape_cast %34 : vector<8xf32> to vector<8x1xf32>
    %36 = vector.broadcast %35 : vector<8x1xf32> to vector<8x8xf32>
    %37 = arith.subf %33, %36 : vector<8x8xf32>
    %38 = math.exp %37 : vector<8x8xf32>
    %cst_20 = arith.constant dense<0.000000e+00> : vector<8xf32>
    %39 = vector.multi_reduction <add>, %38, %cst_20 [1] : vector<8x8xf32> to vector<8xf32>
    %40 = vector.shape_cast %39 : vector<8xf32> to vector<8x1xf32>
    %41 = tpu.reciprocal %40 {approx = true} : vector<8x1xf32> -> vector<8x1xf32>
    %42 = vector.broadcast %41 : vector<8x1xf32> to vector<8x8xf32>
    %43 = arith.mulf %38, %42 : vector<8x8xf32>
    %cst_21 = arith.constant dense<0.000000e+00> : vector<8x128xf32>
    %44 = tpu.matmul %43, %27, %cst_21 {dimension_numbers = #tpu.dot_dimension_numbers<[1], [0], [0], [1], [0, 0, 1, 1], [], []>} : vector<8x8xf32>, vector<8x128xf32>, vector<8x128xf32> -> vector<8x128xf32>
    %c0_22 = arith.constant 0 : index
    %c0_23 = arith.constant 0 : index
    %45 = vector.load %arg4[%c0_22, %c0_23] : memref<8x128xf32, #tpu.memory_space<vmem>>, vector<8x128xf32>
    tpu.vector_store %arg4[%c0_22, %c0_23], %44 {strides = array<i32>} : memref<8x128xf32, #tpu.memory_space<vmem>>, vector<8x128xf32>,
    return
  }
}

</mosaic_0001>

<llo_original>
// kernel: multimodal_forward.1
$region0: #{multimodal_forward.1}
  #allocation0 [shape = 'u32[]', space=smem, size = 0x4, offset = 0x4, fixed_abs, tag = 'smem constant byte address 0x4 - core index']
  #allocation1 [shape = 'u32[144,128]{1,0:T(1,128)}', space=vmem, size = 0x12000, scoped, tag = 'internal scratch']
  %s0 = inlined_call_operand.vmem [shape: s32[8,8], index: 0, kind: input, shape index: {}]
  %s1 = inlined_call_operand.vmem [shape: f32[8,768], index: 1, kind: input, shape index: {}]
  %s2 = inlined_call_operand.vmem [shape: f32[928,32], index: 2, kind: input, shape index: {}]
  %s3 = inlined_call_operand.vmem [shape: f32[72,384], index: 3, kind: input, shape index: {}]
  %s4 = inlined_call_operand.vmem [shape: f32[8,128], index: 4, kind: output, shape index: {}]
  %s5 = sld [smem:[#allocation0]]
  $region26: #{multimodal_forward.1} parent=0
    _
  %s7 = ssub.s32 1, %s5
  %s8 = scalar_select 0, %s7, %s5
  // Predicated region
  $region2: #{multimodal_forward.1} parent=0 // pred_check
    _
  $region3: #{multimodal_forward.1} parent=0 // pred_check_branch
    %10 = sbr.rel (0) target = $region5
  $region4: #{multimodal_forward.1} parent=0 // pred_region
    _
  $region5: #{multimodal_forward.1} parent=0 // pred_fallthru
    _
  // Predicated region
  $region6: #{multimodal_forward.1} parent=0 // pred_check
    _
  $region7: #{multimodal_forward.1} parent=0 // pred_check_branch
    %12 = sbr.rel (0) target = $region9
  $region8: #{multimodal_forward.1} parent=0 // pred_region
    _
  $region9: #{multimodal_forward.1} parent=0 // pred_fallthru
    _
  // Predicated region
  $region10: #{multimodal_forward.1} parent=0 // pred_check
    _
  $region11: #{multimodal_forward.1} parent=0 // pred_check_branch
    %14 = sbr.rel (0) target = $region13
  $region12: #{multimodal_forward.1} parent=0 // pred_region
    _
  $region13: #{multimodal_forward.1} parent=0 // pred_fallthru
    _
  // Predicated region
  $region14: #{multimodal_forward.1} parent=0 // pred_check
    _
  $region15: #{multimodal_forward.1} parent=0 // pred_check_branch
    %16 = sbr.rel (0) target = $region17
  $region16: #{multimodal_forward.1} parent=0 // pred_region
    _
  $region17: #{multimodal_forward.1} parent=0 // pred_fallthru
    _
  %v17 = vld [vmem:[%s2] sm:$0xff]
  %v18 = vld [vmem:[%s2 + $0x8] sm:$0xff]
  %v19 = vld [vmem:[%s2 + $0x10] sm:$0xff]
  %v20 = vld [vmem:[%s2 + $0x18] sm:$0xff]
  %v21 = vld [vmem:[%s2 + $0x20] sm:$0xff]
  %v22 = vld [vmem:[%s2 + $0x28] sm:$0xff]
  %v23 = vld [vmem:[%s2 + $0x30] sm:$0xff]
  %v24 = vld [vmem:[%s2 + $0x38] sm:$0xff]
  %v25 = vld [vmem:[%s2 + $0x40] sm:$0xff]
  %v26 = vld [vmem:[%s2 + $0x48] sm:$0xff]
  %v27 = vld [vmem:[%s2 + $0x50] sm:$0xff]
  %v28 = vld [vmem:[%s2 + $0x58] sm:$0xff]
  %v29 = vld [vmem:[%s2 + $0x60] sm:$0xff]
  %v30 = vld [vmem:[%s2 + $0x68] sm:$0xff]
  %v31 = vld [vmem:[%s2 + $0x70] sm:$0xff]
  %v32 = vld [vmem:[%s2 + $0x78] sm:$0xff]
  %v33 = vld [vmem:[%s2 + $0x80] sm:$0xff]
  %v34 = vld [vmem:[%s2 + $0x88] sm:$0xff]
  %v35 = vld [vmem:[%s2 + $0x90] sm:$0xff]
  %v36 = vld [vmem:[%s2 + $0x98] sm:$0xff]
  %v37 = vld [vmem:[%s2 + $0xa0] sm:$0xff]
  %v38 = vld [vmem:[%s2 + $0xa8] sm:$0xff]
  %v39 = vld [vmem:[%s2 + $0xb0] sm:$0xff]
  %v40 = vld [vmem:[%s2 + $0xb8] sm:$0xff]
  %v41 = vld [vmem:[%s2 + $0xc0] sm:$0xff]
  %v42 = vld [vmem:[%s2 + $0xc8] sm:$0xff]
  %v43 = vld [vmem:[%s2 + $0xd0] sm:$0xff]
  %v44 = vld [vmem:[%s2 + $0xd8] sm:$0xff]
  %v45 = vld [vmem:[%s2 + $0xe0] sm:$0xff]
  %v46 = vld [vmem:[%s2 + $0xe8] sm:$0xff]
  %v47 = vld [vmem:[%s2 + $0xf0] sm:$0xff]
  %v48 = vld [vmem:[%s2 + $0xf8] sm:$0xff]
  %v49 = vld [vmem:[%s2 + $0x100] sm:$0xff]
  %v50 = vld [vmem:[%s2 + $0x108] sm:$0xff]
  %v51 = vld [vmem:[%s2 + $0x110] sm:$0xff]
  %v52 = vld [vmem:[%s2 + $0x118] sm:$0xff]
  %v53 = vld [vmem:[%s2 + $0x120] sm:$0xff]
  %v54 = vld [vmem:[%s2 + $0x128] sm:$0xff]
  %v55 = vld [vmem:[%s2 + $0x130] sm:$0xff]
  %v56 = vld [vmem:[%s2 + $0x138] sm:$0xff]
  %v57 = vld [vmem:[%s2 + $0x140] sm:$0xff]
  %v58 = vld [vmem:[%s2 + $0x148] sm:$0xff]
  %v59 = vld [vmem:[%s2 + $0x150] sm:$0xff]
  %v60 = vld [vmem:[%s2 + $0x158] sm:$0xff]
  %v61 = vld [vmem:[%s2 + $0x160] sm:$0xff]
  %v62 = vld [vmem:[%s2 + $0x168] sm:$0xff]
  %v63 = vld [vmem:[%s2 + $0x170] sm:$0xff]
  %v64 = vld [vmem:[%s2 + $0x178] sm:$0xff]
  %v65 = vld [vmem:[%s2 + $0x180] sm:$0xff]
  %v66 = vld [vmem:[%s2 + $0x188] sm:$0xff]
  %v67 = vld [vmem:[%s2 + $0x190] sm:$0xff]
  %v68 = vld [vmem:[%s2 + $0x198] sm:$0xff]
  %v69 = vld [vmem:[%s2 + $0x1a0] sm:$0xff]
  %v70 = vld [vmem:[%s2 + $0x1a8] sm:$0xff]
  %v71 = vld [vmem:[%s2 + $0x1b0] sm:$0xff]
  %v72 = vld [vmem:[%s2 + $0x1b8] sm:$0xff]
  %v73 = vld [vmem:[%s2 + $0x1c0] sm:$0xff]
  %v74 = vld [vmem:[%s2 + $0x1c8] sm:$0xff]
  %v75 = vld [vmem:[%s2 + $0x1d0] sm:$0xff]
  %v76 = vld [vmem:[%s2 + $0x1d8] sm:$0xff]
  %v77 = vld [vmem:[%s2 + $0x1e0] sm:$0xff]
  %v78 = vld [vmem:[%s2 + $0x1e8] sm:$0xff]
  %v79 = vld [vmem:[%s2 + $0x1f0] sm:$0xff]
  %v80 = vld [vmem:[%s2 + $0x1f8] sm:$0xff]
  %v81 = vld [vmem:[%s2 + $0x200] sm:$0xff]
  %v82 = vld [vmem:[%s2 + $0x208] sm:$0xff]
  %v83 = vld [vmem:[%s2 + $0x210] sm:$0xff]
  %v84 = vld [vmem:[%s2 + $0x218] sm:$0xff]
  %v85 = vld [vmem:[%s2 + $0x220] sm:$0xff]
  %v86 = vld [vmem:[%s2 + $0x228] sm:$0xff]
  %v87 = vld [vmem:[%s2 + $0x230] sm:$0xff]
  %v88 = vld [vmem:[%s2 + $0x238] sm:$0xff]
  %v89 = vld [vmem:[%s2 + $0x240] sm:$0xff]
  %v90 = vld [vmem:[%s2 + $0x248] sm:$0xff]
  %v91 = vld [vmem:[%s2 + $0x250] sm:$0xff]
  %v92 = vld [vmem:[%s2 + $0x258] sm:$0xff]
  %v93 = vld [vmem:[%s2 + $0x260] sm:$0xff]
  %v94 = vld [vmem:[%s2 + $0x268] sm:$0xff]
  %v95 = vld [vmem:[%s2 + $0x270] sm:$0xff]
  %v96 = vld [vmem:[%s2 + $0x278] sm:$0xff]
  %v97 = vld [vmem:[%s2 + $0x280] sm:$0xff]
  %v98 = vld [vmem:[%s2 + $0x288] sm:$0xff]
  %v99 = vld [vmem:[%s2 + $0x290] sm:$0xff]
  %v100 = vld [vmem:[%s2 + $0x298] sm:$0xff]
  %v101 = vld [vmem:[%s2 + $0x2a0] sm:$0xff]
  %v102 = vld [vmem:[%s2 + $0x2a8] sm:$0xff]
  %v103 = vld [vmem:[%s2 + $0x2b0] sm:$0xff]
  %v104 = vld [vmem:[%s2 + $0x2b8] sm:$0xff]
  %v105 = vld [vmem:[%s2 + $0x2c0] sm:$0xff]
  %v106 = vld [vmem:[%s2 + $0x2c8] sm:$0xff]
  %v107 = vld [vmem:[%s2 + $0x2d0] sm:$0xff]
  %v108 = vld [vmem:[%s2 + $0x2d8] sm:$0xff]
  %v109 = vld [vmem:[%s2 + $0x2e0] sm:$0xff]
  %v110 = vld [vmem:[%s2 + $0x2e8] sm:$0xff]
  %v111 = vld [vmem:[%s2 + $0x2f0] sm:$0xff]
  %v112 = vld [vmem:[%s2 + $0x2f8] sm:$0xff]
  %v113 = vld [vmem:[%s2 + $0x300] sm:$0xff]
  %v114 = vld [vmem:[%s2 + $0x308] sm:$0xff]
  %v115 = vld [vmem:[%s2 + $0x310] sm:$0xff]
  %v116 = vld [vmem:[%s2 + $0x318] sm:$0xff]
  %v117 = vld [vmem:[%s2 + $0x320] sm:$0xff]
  %v118 = vld [vmem:[%s2 + $0x328] sm:$0xff]
  %v119 = vld [vmem:[%s2 + $0x330] sm:$0xff]
  %v120 = vld [vmem:[%s2 + $0x338] sm:$0xff]
  %v121 = vld [vmem:[%s2 + $0x340] sm:$0xff]
  %v122 = vld [vmem:[%s2 + $0x348] sm:$0xff]
  %v123 = vld [vmem:[%s2 + $0x350] sm:$0xff]
  %v124 = vld [vmem:[%s2 + $0x358] sm:$0xff]
  %v125 = vld [vmem:[%s2 + $0x360] sm:$0xff]
  %v126 = vld [vmem:[%s2 + $0x368] sm:$0xff]
  %v127 = vld [vmem:[%s2 + $0x370] sm:$0xff]
  %v128 = vld [vmem:[%s2 + $0x378] sm:$0xff]
  %v129 = vld [vmem:[%s2 + $0x380] sm:$0xff]
  %v130 = vld [vmem:[%s2 + $0x388] sm:$0xff]
  %v131 = vld [vmem:[%s2 + $0x390] sm:$0xff]
  %v132 = vld [vmem:[%s2 + $0x398] sm:$0xff]
  %v133 = vld [vmem:[%s3] sm:$0xff]
  %v134 = vld [vmem:[%s3 + $0x8] sm:$0xff]
  %v135 = vld [vmem:[%s3 + $0x10] sm:$0xff]
  %v136 = vld [vmem:[%s3 + $0x18] sm:$0xff]
  %v137 = vld [vmem:[%s3 + $0x20] sm:$0xff]
  %v138 = vld [vmem:[%s3 + $0x28] sm:$0xff]
  %v139 = vld [vmem:[%s3 + $0x30] sm:$0xff]
  %v140 = vld [vmem:[%s3 + $0x38] sm:$0xff]
  %v141 = vld [vmem:[%s3 + $0x40] sm:$0xff]
  %v142 = vld [vmem:[%s3 + $0x48] sm:$0xff]
  %v143 = vld [vmem:[%s3 + $0x50] sm:$0xff]
  %v144 = vld [vmem:[%s3 + $0x58] sm:$0xff]
  %v145 = vld [vmem:[%s3 + $0x60] sm:$0xff]
  %v146 = vld [vmem:[%s3 + $0x68] sm:$0xff]
  %v147 = vld [vmem:[%s3 + $0x70] sm:$0xff]
  %v148 = vld [vmem:[%s3 + $0x78] sm:$0xff]
  %v149 = vld [vmem:[%s3 + $0x80] sm:$0xff]
  %v150 = vld [vmem:[%s3 + $0x88] sm:$0xff]
  %v151 = vld [vmem:[%s3 + $0x90] sm:$0xff]
  %v152 = vld [vmem:[%s3 + $0x98] sm:$0xff]
  %v153 = vld [vmem:[%s3 + $0xa0] sm:$0xff]
  %v154 = vld [vmem:[%s3 + $0xa8] sm:$0xff]
  %v155 = vld [vmem:[%s3 + $0xb0] sm:$0xff]
  %v156 = vld [vmem:[%s3 + $0xb8] sm:$0xff]
  %v157 = vld [vmem:[%s3 + $0xc0] sm:$0xff]
  %v158 = vld [vmem:[%s3 + $0xc8] sm:$0xff]
  %v159 = vld [vmem:[%s3 + $0xd0] sm:$0xff]
  %v160 = vld [vmem:[%s0] sm:$0xff]
  %v161 = vlaneseq
  %v162 = vand.u32 %v161, 127
  %v163 = vlaneseq
  %v164 = vshrl.u32 %v163, 7
  %v165 = vsub.s32 0, %v164
  %v166 = vrot.slane %v160, %v165
  %168 = vbcast.lane.b32.xlu0 %v166, 256
  %v169 = vpop.permute.xlu0 %168
  %v170 = vlaneseq
  %v171 = vshrl.u32 %v170, 7
  %v172 = vsub.s32 1, %v171
  %v173 = vrot.slane %v160, %v172
  %175 = vbcast.lane.b32.xlu0 %v173, 256
  %v176 = vpop.permute.xlu0 %175
  %v177 = vlaneseq
  %v178 = vshrl.u32 %v177, 7
  %v179 = vsub.s32 2, %v178
  %v180 = vrot.slane %v160, %v179
  %182 = vbcast.lane.b32.xlu0 %v180, 256
  %v183 = vpop.permute.xlu0 %182
  %v184 = vlaneseq
  %v185 = vshrl.u32 %v184, 7
  %v186 = vsub.s32 3, %v185
  %v187 = vrot.slane %v160, %v186
  %189 = vbcast.lane.b32.xlu0 %v187, 256
  %v190 = vpop.permute.xlu0 %189
  %v191 = vlaneseq
  %v192 = vshrl.u32 %v191, 7
  %v193 = vsub.s32 4, %v192
  %v194 = vrot.slane %v160, %v193
  %196 = vbcast.lane.b32.xlu0 %v194, 256
  %v197 = vpop.permute.xlu0 %196
  %v198 = vlaneseq
  %v199 = vshrl.u32 %v198, 7
  %v200 = vsub.s32 5, %v199
  %v201 = vrot.slane %v160, %v200
  %203 = vbcast.lane.b32.xlu0 %v201, 256
  %v204 = vpop.permute.xlu0 %203
  %v205 = vlaneseq
  %v206 = vshrl.u32 %v205, 7
  %v207 = vsub.s32 6, %v206
  %v208 = vrot.slane %v160, %v207
  %210 = vbcast.lane.b32.xlu0 %v208, 256
  %v211 = vpop.permute.xlu0 %210
  %v212 = vlaneseq
  %v213 = vshrl.u32 %v212, 7
  %v214 = vsub.s32 7, %v213
  %v215 = vrot.slane %v160, %v214
  %217 = vbcast.lane.b32.xlu0 %v215, 256
  %v218 = vpop.permute.xlu0 %217
  %vm219 = vcmp.eq.s32.totalorder %v169, %v162
  %vm220 = vcmp.eq.s32.totalorder %v176, %v162
  %vm221 = vcmp.eq.s32.totalorder %v183, %v162
  %vm222 = vcmp.eq.s32.totalorder %v190, %v162
  %vm223 = vcmp.eq.s32.totalorder %v197, %v162
  %vm224 = vcmp.eq.s32.totalorder %v204, %v162
  %vm225 = vcmp.eq.s32.totalorder %v211, %v162
  %vm226 = vcmp.eq.s32.totalorder %v218, %v162
  %v227 = vsel %vm219, 1, 0
  %v228 = vsel %vm220, 1, 0
  %v229 = vsel %vm221, 1, 0
  %v230 = vsel %vm222, 1, 0
  %v231 = vsel %vm223, 1, 0
  %v232 = vsel %vm224, 1, 0
  %v233 = vsel %vm225, 1, 0
  %v234 = vsel %vm226, 1, 0
  %v235 = vcvt.s32.f32 %v227
  %v236 = vcvt.s32.f32 %v228
  %v237 = vcvt.s32.f32 %v229
  %v238 = vcvt.s32.f32 %v230
  %v239 = vcvt.s32.f32 %v231
  %v240 = vcvt.s32.f32 %v232
  %v241 = vcvt.s32.f32 %v233
  %v242 = vcvt.s32.f32 %v234
  %v243 = vrot.slane %v235, 4
  %v244 = vadd.f32 %v235, %v243
  %v245 = vrot.slane %v244, 2
  %v246 = vadd.f32 %v244, %v245
  %v247 = vrot.slane %v246, 1
  %v248 = vadd.f32 %v246, %v247
  %v249 = vrot.slane %v236, 4
  %v250 = vadd.f32 %v236, %v249
  %v251 = vrot.slane %v250, 2
  %v252 = vadd.f32 %v250, %v251
  %v253 = vrot.slane %v252, 1
  %v254 = vadd.f32 %v252, %v253
  %v255 = vrot.slane %v237, 4
  %v256 = vadd.f32 %v237, %v255
  %v257 = vrot.slane %v256, 2
  %v258 = vadd.f32 %v256, %v257
  %v259 = vrot.slane %v258, 1
  %v260 = vadd.f32 %v258, %v259
  %v261 = vrot.slane %v238, 4
  %v262 = vadd.f32 %v238, %v261
  %v263 = vrot.slane %v262, 2
  %v264 = vadd.f32 %v262, %v263
  %v265 = vrot.slane %v264, 1
  %v266 = vadd.f32 %v264, %v265
  %v267 = vrot.slane %v239, 4
  %v268 = vadd.f32 %v239, %v267
  %v269 = vrot.slane %v268, 2
  %v270 = vadd.f32 %v268, %v269
  %v271 = vrot.slane %v270, 1
  %v272 = vadd.f32 %v270, %v271
  %v273 = vrot.slane %v240, 4
  %v274 = vadd.f32 %v240, %v273
  %v275 = vrot.slane %v274, 2
  %v276 = vadd.f32 %v274, %v275
  %v277 = vrot.slane %v276, 1
  %v278 = vadd.f32 %v276, %v277
  %v279 = vrot.slane %v241, 4
  %v280 = vadd.f32 %v241, %v279
  %v281 = vrot.slane %v280, 2
  %v282 = vadd.f32 %v280, %v281
  %v283 = vrot.slane %v282, 1
  %v284 = vadd.f32 %v282, %v283
  %v285 = vrot.slane %v242, 4
  %v286 = vadd.f32 %v242, %v285
  %v287 = vrot.slane %v286, 2
  %v288 = vadd.f32 %v286, %v287
  %v289 = vrot.slane %v288, 1
  %v290 = vadd.f32 %v288, %v289
  %vm299 = vcmask 1041409
  %v300 = vsel %vm299, %v254, %v248
  %vm301 = vcmask 1042434
  %v302 = vsel %vm301, %v260, %v300
  %vm303 = vcmask 1043459
  %v304 = vsel %vm303, %v266, %v302
  %vm305 = vcmask 1044484
  %v306 = vsel %vm305, %v272, %v304
  %vm307 = vcmask 1045509
  %v308 = vsel %vm307, %v278, %v306
  %vm309 = vcmask 1046534
  %v310 = vsel %vm309, %v284, %v308
  %vm311 = vcmask 1047559
  %v312 = vsel %vm311, %v290, %v310
  %314 = vmatprep.subr.mxu0 0.0
  %315 = vmatpush1.msra.mxu0 %v17
  %316 = vmatprep.subr.mxu0 0.0
  %317 = vmatpush1.msra.mxu0 %v18
  %318 = vmatprep.subr.mxu0 0.0
  %319 = vmatpush1.msra.mxu0 %v19
  %320 = vmatprep.subr.mxu0 0.0
  %321 = vmatpush1.msra.mxu0 %v20
  %322 = vmatprep.subr.mxu0 0.0
  %323 = vmatpush1.msra.mxu0 %v21
  %324 = vmatprep.subr.mxu0 0.0
  %325 = vmatpush1.msra.mxu0 %v22
  %326 = vmatprep.subr.mxu0 0.0
  %327 = vmatpush1.msra.mxu0 %v23
  %328 = vmatprep.subr.mxu0 0.0
  %329 = vmatpush1.msra.mxu0 %v24
  %330 = vmatprep.subr.mxu0 0.0
  %331 = vmatpush1.msra.mxu0 %v25
  %332 = vmatprep.subr.mxu0 0.0
  %333 = vmatpush1.msra.mxu0 %v26
  %334 = vmatprep.subr.mxu0 0.0
  %335 = vmatpush1.msra.mxu0 %v27
  %336 = vmatprep.subr.mxu0 0.0
  %337 = vmatpush1.msra.mxu0 %v28
  %338 = vmatprep.subr.mxu0 0.0
  %339 = vmatpush1.msra.mxu0 %v29
  %340 = vmatprep.subr.mxu0 0.0
  %341 = vmatpush1.msra.mxu0 %v30
  %342 = vmatprep.subr.mxu0 0.0
  %343 = vmatpush1.msra.mxu0 %v31
  %344 = vmatprep.subr.mxu0 0.0
  %345 = vmatpush1.msra.mxu0 %v32
  %346 = vmatprep.subr.mxu0 0.0
  %347 = vmatpush1.msra.mxu0 0.0
  %348 = vmatprep.subr.mxu0 0.0
  %349 = vmatpush1.msra.mxu0 0.0
  %350 = vmatprep.subr.mxu0 0.0
  %351 = vmatpush1.msra.mxu0 0.0
  %352 = vmatprep.subr.mxu0 0.0
  %353 = vmatpush1.msra.mxu0 0.0
  %354 = vmatprep.subr.mxu0 0.0
  %355 = vmatpush1.msra.mxu0 0.0
  %356 = vmatprep.subr.mxu0 0.0
  %357 = vmatpush1.msra.mxu0 0.0
  %358 = vmatprep.subr.mxu0 0.0
  %359 = vmatpush1.msra.mxu0 0.0
  %360 = vmatprep.subr.mxu0 0.0
  %361 = vmatpush1.msra.mxu0 0.0
  %362 = vmatprep.subr.mxu0 0.0
  %363 = vmatpush1.msra.mxu0 0.0
  %364 = vmatprep.subr.mxu0 0.0
  %365 = vmatpush1.msra.mxu0 0.0
  %366 = vmatprep.subr.mxu0 0.0
  %367 = vmatpush1.msra.mxu0 0.0
  %368 = vmatprep.subr.mxu0 0.0
  %369 = vmatpush1.msra.mxu0 0.0
  %370 = vmatprep.subr.mxu0 0.0
  %371 = vmatpush1.msra.mxu0 0.0
  %372 = vmatprep.subr.mxu0 0.0
  %373 = vmatpush1.msra.mxu0 0.0
  %374 = vmatprep.subr.mxu0 0.0
  %375 = vmatpush1.msra.mxu0 0.0
  %376 = vmatprep.subr.mxu0 0.0
  %377 = vmatpush1.msra.mxu0 0.0
  %378 = vmatprep.mubr.f32.mxu0 0.0
  %379 = vmatmul.mubr.f32.gmra.mrb[0].mxu0 %v312
  %v380 = vpop.f32.mrb[0].mxu0
  %v381 = vadd.f32 0.0, %v380
  %v382 = vpop.f32.mrb[0].mxu0
  %383 = vdwg.mxu0
  %v384 = vmul.f32 %v381, 0.125
  %vm385 = vcmask 261120
  %v387 = vsel %vm385, %v384, 0
  %389 = vmatprep.subr.mxu0 0.0
  %390 = vmatpush1.msra.mxu0 %v33
  %391 = vmatprep.subr.mxu0 0.0
  %392 = vmatpush1.msra.mxu0 %v34
  %393 = vmatprep.subr.mxu0 0.0
  %394 = vmatpush1.msra.mxu0 %v35
  %395 = vmatprep.subr.mxu0 0.0
  %396 = vmatpush1.msra.mxu0 %v36
  %397 = vmatprep.subr.mxu0 0.0
  %398 = vmatpush1.msra.mxu0 0.0
  %399 = vmatprep.subr.mxu0 0.0
  %400 = vmatpush1.msra.mxu0 0.0
  %401 = vmatprep.subr.mxu0 0.0
  %402 = vmatpush1.msra.mxu0 0.0
  %403 = vmatprep.subr.mxu0 0.0
  %404 = vmatpush1.msra.mxu0 0.0
  %405 = vmatprep.subr.mxu0 0.0
  %406 = vmatpush1.msra.mxu0 0.0
  %407 = vmatprep.subr.mxu0 0.0
  %408 = vmatpush1.msra.mxu0 0.0
  %409 = vmatprep.subr.mxu0 0.0
  %410 = vmatpush1.msra.mxu0 0.0
  %411 = vmatprep.subr.mxu0 0.0
  %412 = vmatpush1.msra.mxu0 0.0
  %413 = vmatprep.subr.mxu0 0.0
  %414 = vmatpush1.msra.mxu0 0.0
  %415 = vmatprep.subr.mxu0 0.0
  %416 = vmatpush1.msra.mxu0 0.0
  %417 = vmatprep.subr.mxu0 0.0
  %418 = vmatpush1.msra.mxu0 0.0
  %419 = vmatprep.subr.mxu0 0.0
  %420 = vmatpush1.msra.mxu0 0.0
  %421 = vmatprep.subr.mxu0 0.0
  %422 = vmatpush1.msra.mxu0 0.0
  %423 = vmatprep.subr.mxu0 0.0
  %424 = vmatpush1.msra.mxu0 0.0
  %425 = vmatprep.subr.mxu0 0.0
  %426 = vmatpush1.msra.mxu0 0.0
  %427 = vmatprep.subr.mxu0 0.0
  %428 = vmatpush1.msra.mxu0 0.0
  %429 = vmatprep.subr.mxu0 0.0
  %430 = vmatpush1.msra.mxu0 0.0
  %431 = vmatprep.subr.mxu0 0.0
  %432 = vmatpush1.msra.mxu0 0.0
  %433 = vmatprep.subr.mxu0 0.0
  %434 = vmatpush1.msra.mxu0 0.0
  %435 = vmatprep.subr.mxu0 0.0
  %436 = vmatpush1.msra.mxu0 0.0
  %437 = vmatprep.subr.mxu0 0.0
  %438 = vmatpush1.msra.mxu0 0.0
  %439 = vmatprep.subr.mxu0 0.0
  %440 = vmatpush1.msra.mxu0 0.0
  %441 = vmatprep.subr.mxu0 0.0
  %442 = vmatpush1.msra.mxu0 0.0
  %443 = vmatprep.subr.mxu0 0.0
  %444 = vmatpush1.msra.mxu0 0.0
  %445 = vmatprep.subr.mxu0 0.0
  %446 = vmatpush1.msra.mxu0 0.0
  %447 = vmatprep.subr.mxu0 0.0
  %448 = vmatpush1.msra.mxu0 0.0
  %449 = vmatprep.subr.mxu0 0.0
  %450 = vmatpush1.msra.mxu0 0.0
  %451 = vmatprep.subr.mxu0 0.0
  %452 = vmatpush1.msra.mxu0 0.0
  %453 = vmatprep.mubr.f32.mxu0 0.0
  %454 = vmatmul.mubr.f32.gmra.mrb[0].mxu0 %v387
  %v455 = vpop.f32.mrb[0].mxu0
  %v456 = vadd.f32 0.0, %v455
  %v457 = vpop.f32.mrb[0].mxu0
  %458 = vdwg.mxu0
  %v459 = vtanh.pop %v456
  %v460 = vld [vmem:[%s1] sm:$0xff]
  %v461 = vld [vmem:[%s1 + $0x8] sm:$0xff]
  %v462 = vld [vmem:[%s1 + $0x10] sm:$0xff]
  %v463 = vld [vmem:[%s1 + $0x18] sm:$0xff]
  %v464 = vld [vmem:[%s1 + $0x20] sm:$0xff]
  %v465 = vld [vmem:[%s1 + $0x28] sm:$0xff]
  %466 = vmatprep.subr.mxu0 0.0
  %467 = vmatpush1.msra.mxu0 %v37
  %468 = vmatprep.subr.mxu0 0.0
  %469 = vmatpush1.msra.mxu0 %v38
  %470 = vmatprep.subr.mxu0 0.0
  %471 = vmatpush1.msra.mxu0 %v39
  %472 = vmatprep.subr.mxu0 0.0
  %473 = vmatpush1.msra.mxu0 %v40
  %474 = vmatprep.subr.mxu0 0.0
  %475 = vmatpush1.msra.mxu0 %v41
  %476 = vmatprep.subr.mxu0 0.0
  %477 = vmatpush1.msra.mxu0 %v42
  %478 = vmatprep.subr.mxu0 0.0
  %479 = vmatpush1.msra.mxu0 %v43
  %480 = vmatprep.subr.mxu0 0.0
  %481 = vmatpush1.msra.mxu0 %v44
  %482 = vmatprep.subr.mxu0 0.0
  %483 = vmatpush1.msra.mxu0 %v45
  %484 = vmatprep.subr.mxu0 0.0
  %485 = vmatpush1.msra.mxu0 %v46
  %486 = vmatprep.subr.mxu0 0.0
  %487 = vmatpush1.msra.mxu0 %v47
  %488 = vmatprep.subr.mxu0 0.0
  %489 = vmatpush1.msra.mxu0 %v48
  %490 = vmatprep.subr.mxu0 0.0
  %491 = vmatpush1.msra.mxu0 %v49
  %492 = vmatprep.subr.mxu0 0.0
  %493 = vmatpush1.msra.mxu0 %v50
  %494 = vmatprep.subr.mxu0 0.0
  %495 = vmatpush1.msra.mxu0 %v51
  %496 = vmatprep.subr.mxu0 0.0
  %497 = vmatpush1.msra.mxu0 %v52
  %498 = vmatprep.subr.mxu0 0.0
  %499 = vmatpush1.msra.mxu0 %v53
  %500 = vmatprep.subr.mxu0 0.0
  %501 = vmatpush1.msra.mxu0 %v54
  %502 = vmatprep.subr.mxu0 0.0
  %503 = vmatpush1.msra.mxu0 %v55
  %504 = vmatprep.subr.mxu0 0.0
  %505 = vmatpush1.msra.mxu0 %v56
  %506 = vmatprep.subr.mxu0 0.0
  %507 = vmatpush1.msra.mxu0 %v57
  %508 = vmatprep.subr.mxu0 0.0
  %509 = vmatpush1.msra.mxu0 %v58
  %510 = vmatprep.subr.mxu0 0.0
  %511 = vmatpush1.msra.mxu0 %v59
  %512 = vmatprep.subr.mxu0 0.0
  %513 = vmatpush1.msra.mxu0 %v60
  %514 = vmatprep.subr.mxu0 0.0
  %515 = vmatpush1.msra.mxu0 %v61
  %516 = vmatprep.subr.mxu0 0.0
  %517 = vmatpush1.msra.mxu0 %v62
  %518 = vmatprep.subr.mxu0 0.0
  %519 = vmatpush1.msra.mxu0 %v63
  %520 = vmatprep.subr.mxu0 0.0
  %521 = vmatpush1.msra.mxu0 %v64
  %522 = vmatprep.subr.mxu0 0.0
  %523 = vmatpush1.msra.mxu0 %v65
  %524 = vmatprep.subr.mxu0 0.0
  %525 = vmatpush1.msra.mxu0 %v66
  %526 = vmatprep.subr.mxu0 0.0
  %527 = vmatpush1.msra.mxu0 %v67
  %528 = vmatprep.subr.mxu0 0.0
  %529 = vmatpush1.msra.mxu0 %v68
  %530 = vmatprep.mubr.f32.mxu0 %v461
  %531 = vmatmul.mubr.f32.gmra.mrb[0].mxu0 %v460
  %v532 = vpop.f32.mrb[0].mxu0
  %v533 = vadd.f32 0.0, %v532
  %v534 = vpop.f32.mrb[0].mxu0
  %535 = vdwg.mxu0
  %536 = vmatprep.subr.mxu0 0.0
  %537 = vmatpush1.msra.mxu0 %v69
  %538 = vmatprep.subr.mxu0 0.0
  %539 = vmatpush1.msra.mxu0 %v70
  %540 = vmatprep.subr.mxu0 0.0
  %541 = vmatpush1.msra.mxu0 %v71
  %542 = vmatprep.subr.mxu0 0.0
  %543 = vmatpush1.msra.mxu0 %v72
  %544 = vmatprep.subr.mxu0 0.0
  %545 = vmatpush1.msra.mxu0 %v73
  %546 = vmatprep.subr.mxu0 0.0
  %547 = vmatpush1.msra.mxu0 %v74
  %548 = vmatprep.subr.mxu0 0.0
  %549 = vmatpush1.msra.mxu0 %v75
  %550 = vmatprep.subr.mxu0 0.0
  %551 = vmatpush1.msra.mxu0 %v76
  %552 = vmatprep.subr.mxu0 0.0
  %553 = vmatpush1.msra.mxu0 %v77
  %554 = vmatprep.subr.mxu0 0.0
  %555 = vmatpush1.msra.mxu0 %v78
  %556 = vmatprep.subr.mxu0 0.0
  %557 = vmatpush1.msra.mxu0 %v79
  %558 = vmatprep.subr.mxu0 0.0
  %559 = vmatpush1.msra.mxu0 %v80
  %560 = vmatprep.subr.mxu0 0.0
  %561 = vmatpush1.msra.mxu0 %v81
  %562 = vmatprep.subr.mxu0 0.0
  %563 = vmatpush1.msra.mxu0 %v82
  %564 = vmatprep.subr.mxu0 0.0
  %565 = vmatpush1.msra.mxu0 %v83
  %566 = vmatprep.subr.mxu0 0.0
  %567 = vmatpush1.msra.mxu0 %v84
  %568 = vmatprep.subr.mxu0 0.0
  %569 = vmatpush1.msra.mxu0 %v85
  %570 = vmatprep.subr.mxu0 0.0
  %571 = vmatpush1.msra.mxu0 %v86
  %572 = vmatprep.subr.mxu0 0.0
  %573 = vmatpush1.msra.mxu0 %v87
  %574 = vmatprep.subr.mxu0 0.0
  %575 = vmatpush1.msra.mxu0 %v88
  %576 = vmatprep.subr.mxu0 0.0
  %577 = vmatpush1.msra.mxu0 %v89
  %578 = vmatprep.subr.mxu0 0.0
  %579 = vmatpush1.msra.mxu0 %v90
  %580 = vmatprep.subr.mxu0 0.0
  %581 = vmatpush1.msra.mxu0 %v91
  %582 = vmatprep.subr.mxu0 0.0
  %583 = vmatpush1.msra.mxu0 %v92
  %584 = vmatprep.subr.mxu0 0.0
  %585 = vmatpush1.msra.mxu0 %v93
  %586 = vmatprep.subr.mxu0 0.0
  %587 = vmatpush1.msra.mxu0 %v94
  %588 = vmatprep.subr.mxu0 0.0
  %589 = vmatpush1.msra.mxu0 %v95
  %590 = vmatprep.subr.mxu0 0.0
  %591 = vmatpush1.msra.mxu0 %v96
  %592 = vmatprep.subr.mxu0 0.0
  %593 = vmatpush1.msra.mxu0 %v97
  %594 = vmatprep.subr.mxu0 0.0
  %595 = vmatpush1.msra.mxu0 %v98
  %596 = vmatprep.subr.mxu0 0.0
  %597 = vmatpush1.msra.mxu0 %v99
  %598 = vmatprep.subr.mxu0 0.0
  %599 = vmatpush1.msra.mxu0 %v100
  %600 = vmatprep.mubr.f32.mxu0 %v463
  %601 = vmatmul.mubr.f32.gmra.mrb[0].mxu0 %v462
  %v602 = vpop.f32.mrb[0].mxu0
  %v603 = vadd.f32 %v533, %v602
  %v604 = vpop.f32.mrb[0].mxu0
  %605 = vdwg.mxu0
  %606 = vmatprep.subr.mxu0 0.0
  %607 = vmatpush1.msra.mxu0 %v101
  %608 = vmatprep.subr.mxu0 0.0
  %609 = vmatpush1.msra.mxu0 %v102
  %610 = vmatprep.subr.mxu0 0.0
  %611 = vmatpush1.msra.mxu0 %v103
  %612 = vmatprep.subr.mxu0 0.0
  %613 = vmatpush1.msra.mxu0 %v104
  %614 = vmatprep.subr.mxu0 0.0
  %615 = vmatpush1.msra.mxu0 %v105
  %616 = vmatprep.subr.mxu0 0.0
  %617 = vmatpush1.msra.mxu0 %v106
  %618 = vmatprep.subr.mxu0 0.0
  %619 = vmatpush1.msra.mxu0 %v107
  %620 = vmatprep.subr.mxu0 0.0
  %621 = vmatpush1.msra.mxu0 %v108
  %622 = vmatprep.subr.mxu0 0.0
  %623 = vmatpush1.msra.mxu0 %v109
  %624 = vmatprep.subr.mxu0 0.0
  %625 = vmatpush1.msra.mxu0 %v110
  %626 = vmatprep.subr.mxu0 0.0
  %627 = vmatpush1.msra.mxu0 %v111
  %628 = vmatprep.subr.mxu0 0.0
  %629 = vmatpush1.msra.mxu0 %v112
  %630 = vmatprep.subr.mxu0 0.0
  %631 = vmatpush1.msra.mxu0 %v113
  %632 = vmatprep.subr.mxu0 0.0
  %633 = vmatpush1.msra.mxu0 %v114
  %634 = vmatprep.subr.mxu0 0.0
  %635 = vmatpush1.msra.mxu0 %v115
  %636 = vmatprep.subr.mxu0 0.0
  %637 = vmatpush1.msra.mxu0 %v116
  %638 = vmatprep.subr.mxu0 0.0
  %639 = vmatpush1.msra.mxu0 %v117
  %640 = vmatprep.subr.mxu0 0.0
  %641 = vmatpush1.msra.mxu0 %v118
  %642 = vmatprep.subr.mxu0 0.0
  %643 = vmatpush1.msra.mxu0 %v119
  %644 = vmatprep.subr.mxu0 0.0
  %645 = vmatpush1.msra.mxu0 %v120
  %646 = vmatprep.subr.mxu0 0.0
  %647 = vmatpush1.msra.mxu0 %v121
  %648 = vmatprep.subr.mxu0 0.0
  %649 = vmatpush1.msra.mxu0 %v122
  %650 = vmatprep.subr.mxu0 0.0
  %651 = vmatpush1.msra.mxu0 %v123
  %652 = vmatprep.subr.mxu0 0.0
  %653 = vmatpush1.msra.mxu0 %v124
  %654 = vmatprep.subr.mxu0 0.0
  %655 = vmatpush1.msra.mxu0 %v125
  %656 = vmatprep.subr.mxu0 0.0
  %657 = vmatpush1.msra.mxu0 %v126
  %658 = vmatprep.subr.mxu0 0.0
  %659 = vmatpush1.msra.mxu0 %v127
  %660 = vmatprep.subr.mxu0 0.0
  %661 = vmatpush1.msra.mxu0 %v128
  %662 = vmatprep.subr.mxu0 0.0
  %663 = vmatpush1.msra.mxu0 %v129
  %664 = vmatprep.subr.mxu0 0.0
  %665 = vmatpush1.msra.mxu0 %v130
  %666 = vmatprep.subr.mxu0 0.0
  %667 = vmatpush1.msra.mxu0 %v131
  %668 = vmatprep.subr.mxu0 0.0
  %669 = vmatpush1.msra.mxu0 %v132
  %670 = vmatprep.mubr.f32.mxu0 %v465
  %671 = vmatmul.mubr.f32.gmra.mrb[0].mxu0 %v464
  %v672 = vpop.f32.mrb[0].mxu0
  %v673 = vadd.f32 %v603, %v672
  %v674 = vpop.f32.mrb[0].mxu0
  %675 = vdwg.mxu0
  %v677 = vsel %vm385, %v673, 0
  %679 = vmatprep.subr.mxu0 %v146
  %680 = vmatpush1.msra.mxu0 %v145
  %681 = vmatprep.subr.mxu0 %v149
  %682 = vmatpush1.msra.mxu0 %v148
  %683 = vmatprep.subr.mxu0 %v152
  %684 = vmatpush1.msra.mxu0 %v151
  %685 = vmatprep.subr.mxu0 %v155
  %686 = vmatpush1.msra.mxu0 %v154
  %687 = vmatprep.subr.mxu0 0.0
  %688 = vmatpush1.msra.mxu0 0.0
  %689 = vmatprep.subr.mxu0 0.0
  %690 = vmatpush1.msra.mxu0 0.0
  %691 = vmatprep.subr.mxu0 0.0
  %692 = vmatpush1.msra.mxu0 0.0
  %693 = vmatprep.subr.mxu0 0.0
  %694 = vmatpush1.msra.mxu0 0.0
  %695 = vmatprep.subr.mxu0 0.0
  %696 = vmatpush1.msra.mxu0 0.0
  %697 = vmatprep.subr.mxu0 0.0
  %698 = vmatpush1.msra.mxu0 0.0
  %699 = vmatprep.subr.mxu0 0.0
  %700 = vmatpush1.msra.mxu0 0.0
  %701 = vmatprep.subr.mxu0 0.0
  %702 = vmatpush1.msra.mxu0 0.0
  %703 = vmatprep.subr.mxu0 0.0
  %704 = vmatpush1.msra.mxu0 0.0
  %705 = vmatprep.subr.mxu0 0.0
  %706 = vmatpush1.msra.mxu0 0.0
  %707 = vmatprep.subr.mxu0 0.0
  %708 = vmatpush1.msra.mxu0 0.0
  %709 = vmatprep.subr.mxu0 0.0
  %710 = vmatpush1.msra.mxu0 0.0
  %711 = vmatprep.subr.mxu0 0.0
  %712 = vmatpush1.msra.mxu0 0.0
  %713 = vmatprep.subr.mxu0 0.0
  %714 = vmatpush1.msra.mxu0 0.0
  %715 = vmatprep.subr.mxu0 0.0
  %716 = vmatpush1.msra.mxu0 0.0
  %717 = vmatprep.subr.mxu0 0.0
  %718 = vmatpush1.msra.mxu0 0.0
  %719 = vmatprep.subr.mxu0 0.0
  %720 = vmatpush1.msra.mxu0 0.0
  %721 = vmatprep.subr.mxu0 0.0
  %722 = vmatpush1.msra.mxu0 0.0
  %723 = vmatprep.subr.mxu0 0.0
  %724 = vmatpush1.msra.mxu0 0.0
  %725 = vmatprep.subr.mxu0 0.0
  %726 = vmatpush1.msra.mxu0 0.0
  %727 = vmatprep.subr.mxu0 0.0
  %728 = vmatpush1.msra.mxu0 0.0
  %729 = vmatprep.subr.mxu0 0.0
  %730 = vmatpush1.msra.mxu0 0.0
  %731 = vmatprep.subr.mxu0 0.0
  %732 = vmatpush1.msra.mxu0 0.0
  %733 = vmatprep.subr.mxu0 0.0
  %734 = vmatpush1.msra.mxu0 0.0
  %735 = vmatprep.subr.mxu0 0.0
  %736 = vmatpush1.msra.mxu0 0.0
  %737 = vmatprep.subr.mxu0 0.0
  %738 = vmatpush1.msra.mxu0 0.0
  %739 = vmatprep.subr.mxu0 0.0
  %740 = vmatpush1.msra.mxu0 0.0
  %741 = vmatprep.subr.mxu0 0.0
  %742 = vmatpush1.msra.mxu0 0.0
  %743 = vmatprep.mubr.f32.mxu0 0.0
  %744 = vmatmul.mubr.f32.gmra.mrb[0].mxu0 %v677
  %v745 = vpop.f32.mrb[0].mxu0
  %v746 = vadd.f32 0.0, %v745
  %v747 = vpop.f32.mrb[0].mxu0
  %v748 = vadd.f32 0.0, %v747
  %749 = vdwg.mxu0
  %750 = vmatprep.subr.mxu0 0.0
  %751 = vmatpush1.msra.mxu0 %v147
  %752 = vmatprep.subr.mxu0 0.0
  %753 = vmatpush1.msra.mxu0 %v150
  %754 = vmatprep.subr.mxu0 0.0
  %755 = vmatpush1.msra.mxu0 %v153
  %756 = vmatprep.subr.mxu0 0.0
  %757 = vmatpush1.msra.mxu0 %v156
  %758 = vmatprep.subr.mxu0 0.0
  %759 = vmatpush1.msra.mxu0 0.0
  %760 = vmatprep.subr.mxu0 0.0
  %761 = vmatpush1.msra.mxu0 0.0
  %762 = vmatprep.subr.mxu0 0.0
  %763 = vmatpush1.msra.mxu0 0.0
  %764 = vmatprep.subr.mxu0 0.0
  %765 = vmatpush1.msra.mxu0 0.0
  %766 = vmatprep.subr.mxu0 0.0
  %767 = vmatpush1.msra.mxu0 0.0
  %768 = vmatprep.subr.mxu0 0.0
  %769 = vmatpush1.msra.mxu0 0.0
  %770 = vmatprep.subr.mxu0 0.0
  %771 = vmatpush1.msra.mxu0 0.0
  %772 = vmatprep.subr.mxu0 0.0
  %773 = vmatpush1.msra.mxu0 0.0
  %774 = vmatprep.subr.mxu0 0.0
  %775 = vmatpush1.msra.mxu0 0.0
  %776 = vmatprep.subr.mxu0 0.0
  %777 = vmatpush1.msra.mxu0 0.0
  %778 = vmatprep.subr.mxu0 0.0
  %779 = vmatpush1.msra.mxu0 0.0
  %780 = vmatprep.subr.mxu0 0.0
  %781 = vmatpush1.msra.mxu0 0.0
  %782 = vmatprep.subr.mxu0 0.0
  %783 = vmatpush1.msra.mxu0 0.0
  %784 = vmatprep.subr.mxu0 0.0
  %785 = vmatpush1.msra.mxu0 0.0
  %786 = vmatprep.subr.mxu0 0.0
  %787 = vmatpush1.msra.mxu0 0.0
  %788 = vmatprep.subr.mxu0 0.0
  %789 = vmatpush1.msra.mxu0 0.0
  %790 = vmatprep.subr.mxu0 0.0
  %791 = vmatpush1.msra.mxu0 0.0
  %792 = vmatprep.subr.mxu0 0.0
  %793 = vmatpush1.msra.mxu0 0.0
  %794 = vmatprep.subr.mxu0 0.0
  %795 = vmatpush1.msra.mxu0 0.0
  %796 = vmatprep.subr.mxu0 0.0
  %797 = vmatpush1.msra.mxu0 0.0
  %798 = vmatprep.subr.mxu0 0.0
  %799 = vmatpush1.msra.mxu0 0.0
  %800 = vmatprep.subr.mxu0 0.0
  %801 = vmatpush1.msra.mxu0 0.0
  %802 = vmatprep.subr.mxu0 0.0
  %803 = vmatpush1.msra.mxu0 0.0
  %804 = vmatprep.subr.mxu0 0.0
  %805 = vmatpush1.msra.mxu0 0.0
  %806 = vmatprep.subr.mxu0 0.0
  %807 = vmatpush1.msra.mxu0 0.0
  %808 = vmatprep.subr.mxu0 0.0
  %809 = vmatpush1.msra.mxu0 0.0
  %810 = vmatprep.subr.mxu0 0.0
  %811 = vmatpush1.msra.mxu0 0.0
  %812 = vmatprep.subr.mxu0 0.0
  %813 = vmatpush1.msra.mxu0 0.0
  %814 = vmatprep.mubr.f32.mxu0 0.0
  %815 = vmatmul.mubr.f32.gmra.mrb[0].mxu0 %v677
  %v816 = vpop.f32.mrb[0].mxu0
  %v817 = vadd.f32 0.0, %v816
  %v818 = vpop.f32.mrb[0].mxu0
  %819 = vdwg.mxu0
  %v821 = vsel %vm385, %v459, 0
  %823 = vmatprep.subr.mxu0 %v134
  %824 = vmatpush1.msra.mxu0 %v133
  %825 = vmatprep.subr.mxu0 %v137
  %826 = vmatpush1.msra.mxu0 %v136
  %827 = vmatprep.subr.mxu0 %v140
  %828 = vmatpush1.msra.mxu0 %v139
  %829 = vmatprep.subr.mxu0 %v143
  %830 = vmatpush1.msra.mxu0 %v142
  %831 = vmatprep.subr.mxu0 0.0
  %832 = vmatpush1.msra.mxu0 0.0
  %833 = vmatprep.subr.mxu0 0.0
  %834 = vmatpush1.msra.mxu0 0.0
  %835 = vmatprep.subr.mxu0 0.0
  %836 = vmatpush1.msra.mxu0 0.0
  %837 = vmatprep.subr.mxu0 0.0
  %838 = vmatpush1.msra.mxu0 0.0
  %839 = vmatprep.subr.mxu0 0.0
  %840 = vmatpush1.msra.mxu0 0.0
  %841 = vmatprep.subr.mxu0 0.0
  %842 = vmatpush1.msra.mxu0 0.0
  %843 = vmatprep.subr.mxu0 0.0
  %844 = vmatpush1.msra.mxu0 0.0
  %845 = vmatprep.subr.mxu0 0.0
  %846 = vmatpush1.msra.mxu0 0.0
  %847 = vmatprep.subr.mxu0 0.0
  %848 = vmatpush1.msra.mxu0 0.0
  %849 = vmatprep.subr.mxu0 0.0
  %850 = vmatpush1.msra.mxu0 0.0
  %851 = vmatprep.subr.mxu0 0.0
  %852 = vmatpush1.msra.mxu0 0.0
  %853 = vmatprep.subr.mxu0 0.0
  %854 = vmatpush1.msra.mxu0 0.0
  %855 = vmatprep.subr.mxu0 0.0
  %856 = vmatpush1.msra.mxu0 0.0
  %857 = vmatprep.subr.mxu0 0.0
  %858 = vmatpush1.msra.mxu0 0.0
  %859 = vmatprep.subr.mxu0 0.0
  %860 = vmatpush1.msra.mxu0 0.0
  %861 = vmatprep.subr.mxu0 0.0
  %862 = vmatpush1.msra.mxu0 0.0
  %863 = vmatprep.subr.mxu0 0.0
  %864 = vmatpush1.msra.mxu0 0.0
  %865 = vmatprep.subr.mxu0 0.0
  %866 = vmatpush1.msra.mxu0 0.0
  %867 = vmatprep.subr.mxu0 0.0
  %868 = vmatpush1.msra.mxu0 0.0
  %869 = vmatprep.subr.mxu0 0.0
  %870 = vmatpush1.msra.mxu0 0.0
  %871 = vmatprep.subr.mxu0 0.0
  %872 = vmatpush1.msra.mxu0 0.0
  %873 = vmatprep.subr.mxu0 0.0
  %874 = vmatpush1.msra.mxu0 0.0
  %875 = vmatprep.subr.mxu0 0.0
  %876 = vmatpush1.msra.mxu0 0.0
  %877 = vmatprep.subr.mxu0 0.0
  %878 = vmatpush1.msra.mxu0 0.0
  %879 = vmatprep.subr.mxu0 0.0
  %880 = vmatpush1.msra.mxu0 0.0
  %881 = vmatprep.subr.mxu0 0.0
  %882 = vmatpush1.msra.mxu0 0.0
  %883 = vmatprep.subr.mxu0 0.0
  %884 = vmatpush1.msra.mxu0 0.0
  %885 = vmatprep.subr.mxu0 0.0
  %886 = vmatpush1.msra.mxu0 0.0
  %887 = vmatprep.mubr.f32.mxu0 0.0
  %888 = vmatmul.mubr.f32.gmra.mrb[0].mxu0 %v821
  %v889 = vpop.f32.mrb[0].mxu0
  %v890 = vadd.f32 %v746, %v889
  %v891 = vpop.f32.mrb[0].mxu0
  %v892 = vadd.f32 %v748, %v891
  %893 = vdwg.mxu0
  %894 = vmatprep.subr.mxu0 0.0
  %895 = vmatpush1.msra.mxu0 %v135
  %896 = vmatprep.subr.mxu0 0.0
  %897 = vmatpush1.msra.mxu0 %v138
  %898 = vmatprep.subr.mxu0 0.0
  %899 = vmatpush1.msra.mxu0 %v141
  %900 = vmatprep.subr.mxu0 0.0
  %901 = vmatpush1.msra.mxu0 %v144
  %902 = vmatprep.subr.mxu0 0.0
  %903 = vmatpush1.msra.mxu0 0.0
  %904 = vmatprep.subr.mxu0 0.0
  %905 = vmatpush1.msra.mxu0 0.0
  %906 = vmatprep.subr.mxu0 0.0
  %907 = vmatpush1.msra.mxu0 0.0
  %908 = vmatprep.subr.mxu0 0.0
  %909 = vmatpush1.msra.mxu0 0.0
  %910 = vmatprep.subr.mxu0 0.0
  %911 = vmatpush1.msra.mxu0 0.0
  %912 = vmatprep.subr.mxu0 0.0
  %913 = vmatpush1.msra.mxu0 0.0
  %914 = vmatprep.subr.mxu0 0.0
  %915 = vmatpush1.msra.mxu0 0.0
  %916 = vmatprep.subr.mxu0 0.0
  %917 = vmatpush1.msra.mxu0 0.0
  %918 = vmatprep.subr.mxu0 0.0
  %919 = vmatpush1.msra.mxu0 0.0
  %920 = vmatprep.subr.mxu0 0.0
  %921 = vmatpush1.msra.mxu0 0.0
  %922 = vmatprep.subr.mxu0 0.0
  %923 = vmatpush1.msra.mxu0 0.0
  %924 = vmatprep.subr.mxu0 0.0
  %925 = vmatpush1.msra.mxu0 0.0
  %926 = vmatprep.subr.mxu0 0.0
  %927 = vmatpush1.msra.mxu0 0.0
  %928 = vmatprep.subr.mxu0 0.0
  %929 = vmatpush1.msra.mxu0 0.0
  %930 = vmatprep.subr.mxu0 0.0
  %931 = vmatpush1.msra.mxu0 0.0
  %932 = vmatprep.subr.mxu0 0.0
  %933 = vmatpush1.msra.mxu0 0.0
  %934 = vmatprep.subr.mxu0 0.0
  %935 = vmatpush1.msra.mxu0 0.0
  %936 = vmatprep.subr.mxu0 0.0
  %937 = vmatpush1.msra.mxu0 0.0
  %938 = vmatprep.subr.mxu0 0.0
  %939 = vmatpush1.msra.mxu0 0.0
  %940 = vmatprep.subr.mxu0 0.0
  %941 = vmatpush1.msra.mxu0 0.0
  %942 = vmatprep.subr.mxu0 0.0
  %943 = vmatpush1.msra.mxu0 0.0
  %944 = vmatprep.subr.mxu0 0.0
  %945 = vmatpush1.msra.mxu0 0.0
  %946 = vmatprep.subr.mxu0 0.0
  %947 = vmatpush1.msra.mxu0 0.0
  %948 = vmatprep.subr.mxu0 0.0
  %949 = vmatpush1.msra.mxu0 0.0
  %950 = vmatprep.subr.mxu0 0.0
  %951 = vmatpush1.msra.mxu0 0.0
  %952 = vmatprep.subr.mxu0 0.0
  %953 = vmatpush1.msra.mxu0 0.0
  %954 = vmatprep.subr.mxu0 0.0
  %955 = vmatpush1.msra.mxu0 0.0
  %956 = vmatprep.subr.mxu0 0.0
  %957 = vmatpush1.msra.mxu0 0.0
  %958 = vmatprep.mubr.f32.mxu0 0.0
  %959 = vmatmul.mubr.f32.gmra.mrb[0].mxu0 %v821
  %v960 = vpop.f32.mrb[0].mxu0
  %v961 = vadd.f32 %v817, %v960
  %v962 = vpop.f32.mrb[0].mxu0
  %963 = vdwg.mxu0
  %v964 = vadd.f32 %v890, %v157
  %v965 = vadd.f32 %v892, %v158
  %v966 = vadd.f32 %v961, %v159
  %967 = vmatprep.subr.mxu0 0.0
  %968 = vmatpush1.xpose.msra.mxu0 %v965
  %969 = vmatprep.subr.mxu0 0.0
  %970 = vmatpush1.xpose.msra.mxu0 0.0
  %971 = vmatprep.subr.mxu0 0.0
  %972 = vmatpush1.xpose.msra.mxu0 0.0
  %973 = vmatprep.subr.mxu0 0.0
  %974 = vmatpush1.xpose.msra.mxu0 0.0
  %975 = vmatprep.subr.mxu0 0.0
  %976 = vmatpush1.xpose.msra.mxu0 0.0
  %977 = vmatprep.subr.mxu0 0.0
  %978 = vmatpush1.xpose.msra.mxu0 0.0
  %979 = vmatprep.subr.mxu0 0.0
  %980 = vmatpush1.xpose.msra.mxu0 0.0
  %981 = vmatprep.subr.mxu0 0.0
  %982 = vmatpush1.xpose.msra.mxu0 0.0
  %983 = vmatprep.subr.mxu0 0.0
  %984 = vmatpush1.xpose.msra.mxu0 0.0
  %985 = vmatprep.subr.mxu0 0.0
  %986 = vmatpush1.xpose.msra.mxu0 0.0
  %987 = vmatprep.subr.mxu0 0.0
  %988 = vmatpush1.xpose.msra.mxu0 0.0
  %989 = vmatprep.subr.mxu0 0.0
  %990 = vmatpush1.xpose.msra.mxu0 0.0
  %991 = vmatprep.subr.mxu0 0.0
  %992 = vmatpush1.xpose.msra.mxu0 0.0
  %993 = vmatprep.subr.mxu0 0.0
  %994 = vmatpush1.xpose.msra.mxu0 0.0
  %995 = vmatprep.subr.mxu0 0.0
  %996 = vmatpush1.xpose.msra.mxu0 0.0
  %997 = vmatprep.subr.mxu0 0.0
  %998 = vmatpush1.xpose.msra.mxu0 0.0
  %999 = vmatprep.subr.mxu0 0.0
  %1000 = vmatpush1.xpose.msra.mxu0 0.0
  %1001 = vmatprep.subr.mxu0 0.0
  %1002 = vmatpush1.xpose.msra.mxu0 0.0
  %1003 = vmatprep.subr.mxu0 0.0
  %1004 = vmatpush1.xpose.msra.mxu0 0.0
  %1005 = vmatprep.subr.mxu0 0.0
  %1006 = vmatpush1.xpose.msra.mxu0 0.0
  %1007 = vmatprep.subr.mxu0 0.0
  %1008 = vmatpush1.xpose.msra.mxu0 0.0
  %1009 = vmatprep.subr.mxu0 0.0
  %1010 = vmatpush1.xpose.msra.mxu0 0.0
  %1011 = vmatprep.subr.mxu0 0.0
  %1012 = vmatpush1.xpose.msra.mxu0 0.0
  %1013 = vmatprep.subr.mxu0 0.0
  %1014 = vmatpush1.xpose.msra.mxu0 0.0
  %1015 = vmatprep.subr.mxu0 0.0
  %1016 = vmatpush1.xpose.msra.mxu0 0.0
  %1017 = vmatprep.subr.mxu0 0.0
  %1018 = vmatpush1.xpose.msra.mxu0 0.0
  %1019 = vmatprep.subr.mxu0 0.0
  %1020 = vmatpush1.xpose.msra.mxu0 0.0
  %1021 = vmatprep.subr.mxu0 0.0
  %1022 = vmatpush1.xpose.msra.mxu0 0.0
  %1023 = vmatprep.subr.mxu0 0.0
  %1024 = vmatpush1.xpose.msra.mxu0 0.0
  %1025 = vmatprep.subr.mxu0 0.0
  %1026 = vmatpush1.xpose.msra.mxu0 0.0
  %1027 = vmatprep.subr.mxu0 0.0
  %1028 = vmatpush1.xpose.msra.mxu0 0.0
  %1029 = vmatprep.subr.mxu0 0.0
  %1030 = vmatpush1.xpose.msra.mxu0 0.0
  %1031 = vmatprep.mubr.f32.mxu0 0.0
  %1032 = vmatmul.mubr.f32.gmra.mrb[0].mxu0 %v964
  %v1033 = vpop.f32.mrb[0].mxu0
  %v1034 = vadd.f32 0.0, %v1033
  %v1035 = vpop.f32.mrb[0].mxu0
  %1036 = vdwg.mxu0
  %vm1037 = vcmp.lt.s32.totalorder %v162, 2
  %v1038 = vsel %vm1037, %v1034, -1e+30
  %vm1039 = vcmask 64512
  %v1040 = vsel %vm1039, %v1038, -inf
  %1041 = vmax.xlane.f32.xlu0 %v1040
  %v1042 = vpop.xlane.xlu0 %1041
  %v1043 = vsub.f32 %v1038, %v1042
  %v1044 = vmul.f32 %v1043, 1.442695
  %v1045 = vpow.pop %v1044
  %v1046 = vsel %vm1039, %v1045, 0.0
  %1047 = vadd.xlane.f32.xlu0 %v1046
  %v1048 = vpop.xlane.xlu0 %1047
  %v1049 = vrcp.pop %v1048
  %v1050 = vmul.f32 %v1045, %v1049
  %v1052 = vsel %vm1039, %v1050, 0
  %1054 = vmatprep.subr.mxu0 0.0
  %1055 = vmatpush1.msra.mxu0 %v966
  %1056 = vmatprep.subr.mxu0 0.0
  %1057 = vmatpush1.msra.mxu0 0.0
  %1058 = vmatprep.subr.mxu0 0.0
  %1059 = vmatpush1.msra.mxu0 0.0
  %1060 = vmatprep.subr.mxu0 0.0
  %1061 = vmatpush1.msra.mxu0 0.0
  %1062 = vmatprep.subr.mxu0 0.0
  %1063 = vmatpush1.msra.mxu0 0.0
  %1064 = vmatprep.subr.mxu0 0.0
  %1065 = vmatpush1.msra.mxu0 0.0
  %1066 = vmatprep.subr.mxu0 0.0
  %1067 = vmatpush1.msra.mxu0 0.0
  %1068 = vmatprep.subr.mxu0 0.0
  %1069 = vmatpush1.msra.mxu0 0.0
  %1070 = vmatprep.subr.mxu0 0.0
  %1071 = vmatpush1.msra.mxu0 0.0
  %1072 = vmatprep.subr.mxu0 0.0
  %1073 = vmatpush1.msra.mxu0 0.0
  %1074 = vmatprep.subr.mxu0 0.0
  %1075 = vmatpush1.msra.mxu0 0.0
  %1076 = vmatprep.subr.mxu0 0.0
  %1077 = vmatpush1.msra.mxu0 0.0
  %1078 = vmatprep.subr.mxu0 0.0
  %1079 = vmatpush1.msra.mxu0 0.0
  %1080 = vmatprep.subr.mxu0 0.0
  %1081 = vmatpush1.msra.mxu0 0.0
  %1082 = vmatprep.subr.mxu0 0.0
  %1083 = vmatpush1.msra.mxu0 0.0
  %1084 = vmatprep.subr.mxu0 0.0
  %1085 = vmatpush1.msra.mxu0 0.0
  %1086 = vmatprep.subr.mxu0 0.0
  %1087 = vmatpush1.msra.mxu0 0.0
  %1088 = vmatprep.subr.mxu0 0.0
  %1089 = vmatpush1.msra.mxu0 0.0
  %1090 = vmatprep.subr.mxu0 0.0
  %1091 = vmatpush1.msra.mxu0 0.0
  %1092 = vmatprep.subr.mxu0 0.0
  %1093 = vmatpush1.msra.mxu0 0.0
  %1094 = vmatprep.subr.mxu0 0.0
  %1095 = vmatpush1.msra.mxu0 0.0
  %1096 = vmatprep.subr.mxu0 0.0
  %1097 = vmatpush1.msra.mxu0 0.0
  %1098 = vmatprep.subr.mxu0 0.0
  %1099 = vmatpush1.msra.mxu0 0.0
  %1100 = vmatprep.subr.mxu0 0.0
  %1101 = vmatpush1.msra.mxu0 0.0
  %1102 = vmatprep.subr.mxu0 0.0
  %1103 = vmatpush1.msra.mxu0 0.0
  %1104 = vmatprep.subr.mxu0 0.0
  %1105 = vmatpush1.msra.mxu0 0.0
  %1106 = vmatprep.subr.mxu0 0.0
  %1107 = vmatpush1.msra.mxu0 0.0
  %1108 = vmatprep.subr.mxu0 0.0
  %1109 = vmatpush1.msra.mxu0 0.0
  %1110 = vmatprep.subr.mxu0 0.0
  %1111 = vmatpush1.msra.mxu0 0.0
  %1112 = vmatprep.subr.mxu0 0.0
  %1113 = vmatpush1.msra.mxu0 0.0
  %1114 = vmatprep.subr.mxu0 0.0
  %1115 = vmatpush1.msra.mxu0 0.0
  %1116 = vmatprep.subr.mxu0 0.0
  %1117 = vmatpush1.msra.mxu0 0.0
  %1118 = vmatprep.mubr.f32.mxu0 0.0
  %1119 = vmatmul.mubr.f32.gmra.mrb[0].mxu0 %v1052
  %v1120 = vpop.f32.mrb[0].mxu0
  %v1121 = vadd.f32 0.0, %v1120
  %v1122 = vpop.f32.mrb[0].mxu0
  %1123 = vdwg.mxu0
  %1124 = vst [vmem:[%s4] sm:$0xff] %v1121
  // Predicated region
  $region18: #{multimodal_forward.1} parent=0 // pred_check
    _
  $region19: #{multimodal_forward.1} parent=0 // pred_check_branch
    %1126 = sbr.rel (0) target = $region21
  $region20: #{multimodal_forward.1} parent=0 // pred_region
    _
  $region21: #{multimodal_forward.1} parent=0 // pred_fallthru
    _
  // Predicated region
  $region22: #{multimodal_forward.1} parent=0 // pred_check
    _
  $region23: #{multimodal_forward.1} parent=0 // pred_check_branch
    %1128 = sbr.rel (0) target = $region25
  $region24: #{multimodal_forward.1} parent=0 // pred_region
    _
  $region25: #{multimodal_forward.1} parent=0 // pred_fallthru
    _

</llo_original>
